<compile_context>
chip_gen: v7x
topology: tpu7x:2x2x1
jax: 0.10.0
libtpu: 0.0.40
codegen_flags: <defaults>
</compile_context>

<pallas_src>
import functools

import jax
import jax.numpy as jnp
from jax.experimental import pallas as pl
from jax.experimental.pallas import tpu as pltpu


def _round_up(n, m):
    return ((n + m - 1) // m) * m


def _choose_batch_tile(B):
    """Pick (tm, b_pad): >=2 grid steps when possible (v7x two-core sharding of the
    'parallel' batch axis) and 256-512 row tiles at large batch (per-step-overhead
    amortization / MXU feed on v5e/v6e)."""
    b8 = _round_up(B, 8)
    if b8 <= 64:                                   # too small to split usefully
        return b8, b8
    target = 256 if b8 <= 4096 else 512
    nsteps = max(2, -(-b8 // target))
    tm = _round_up(-(-b8 // nsteps), 8)
    return tm, _round_up(b8, tm)


def _mlp_kernel(*refs, num_layers):
    # refs = (x_ref, w_0..w_{L-1}, b_0..b_{L-1}, o_ref)
    x_ref = refs[0]
    w_refs = refs[1:1 + num_layers]
    b_refs = refs[1 + num_layers:1 + 2 * num_layers]
    o_ref = refs[1 + 2 * num_layers]

    h = x_ref[...].astype(jnp.float32)             # activations stay in VMEM/vregs
    for l in range(num_layers):                    # static unroll: L known at trace time
        y = jnp.dot(h.astype(jnp.bfloat16), w_refs[l][...],   # bf16 MXU, f32 accumulate
                    preferred_element_type=jnp.float32)
        h = jnp.maximum(y + b_refs[l][...], 0.0)   # f32 bias + ReLU on the VPU
    o_ref[...] = h.astype(o_ref.dtype)


def fused_mlp(x, w_list, b_list, *, tm):
    """out = relu(... relu(x @ W0 + b0) ... @ W_{L-1} + b_{L-1}) in one pallas_call."""
    B_pad, d_in = x.shape
    L = len(w_list)
    n_out_pad = w_list[-1].shape[1]
    grid = (B_pad // tm,)

    flops = sum(2 * B_pad * w.shape[0] * w.shape[1] for w in w_list)
    bytes_accessed = (x.size * x.dtype.itemsize
                      + sum(w.size * w.dtype.itemsize for w in w_list)
                      + sum(b.size * b.dtype.itemsize for b in b_list)
                      + B_pad * n_out_pad * 4)

    # Explicit VMEM budget (resident weights+biases, double-buffered in/out tiles,
    # headroom for the h/y temporaries).
    resident1 = (sum(w.size * w.dtype.itemsize for w in w_list)
                 + sum(b.size * b.dtype.itemsize for b in b_list))
    act_rows = max(max(w.shape) for w in w_list)
    streamed = 2 * tm * (d_in + n_out_pad) * 4
    scratch = 4 * tm * act_rows * 4
    need = resident1 + streamed + scratch
    # TODO(synk): when `need` exceeds the VMEM budget, switch to a layer-axis grid
    # (grid=(B_pad//tm, L), per-layer Buffered(2) weights + VMEM activation scratch)
    # instead of the fully-resident weight stack.
    if need > (56 << 20):
        raise ValueError(
            f"FCBody fused weight stack needs ~{need >> 20} MiB VMEM; "
            "layer-tiled schedule not implemented.")

    def run(single_buffer_resident):
        use_sb = single_buffer_resident and hasattr(pl, "Buffered")
        res_kw = dict(pipeline_mode=pl.Buffered(1)) if use_sb else {}
        n_bufs = 1 if use_sb else 2
        vmem_limit = min(max(resident1 * n_bufs + streamed + scratch + (4 << 20),
                             32 << 20),
                         64 << 20)   # conservative cap: fits every generation incl. v7x

        in_specs = [pl.BlockSpec((tm, d_in), lambda i: (i, 0))]          # batch tile
        in_specs += [pl.BlockSpec(w.shape, lambda i: (0, 0), **res_kw)   # resident W_l
                     for w in w_list]
        in_specs += [pl.BlockSpec(b.shape, lambda i: (0, 0), **res_kw)   # resident b_l
                     for b in b_list]

        return pl.pallas_call(
            functools.partial(_mlp_kernel, num_layers=L),
            out_shape=jax.ShapeDtypeStruct((B_pad, n_out_pad), jnp.float32),
            grid_spec=pltpu.PrefetchScalarGridSpec(
                num_scalar_prefetch=0,
                grid=grid,
                in_specs=in_specs,
                out_specs=pl.BlockSpec((tm, n_out_pad), lambda i: (i, 0)),
            ),
            compiler_params=pltpu.CompilerParams(
                dimension_semantics=("parallel",),   # batch axis: shard across v7x TCs
                vmem_limit_bytes=vmem_limit,
            ),
            cost_estimate=pl.CostEstimate(
                flops=flops, transcendentals=0, bytes_accessed=bytes_accessed),
        )(x, *w_list, *b_list)

    try:
        return run(True)
    except Exception:
        # Fallback for JAX builds that reject single-buffered resident blocks.
        return run(False)


def orthogonal_weight(key, out_features, in_features, w_scale=1.0):
    """Orthogonal init (nn.init.orthogonal_ parity), stored as (in, out) for x @ W."""
    init = jax.nn.initializers.orthogonal(scale=w_scale)
    w_torch_layout = init(key, (out_features, in_features), jnp.float32)  # (out, in)
    return w_torch_layout.T                                               # (in, out)


class FCBodyPallas:
    def __init__(self, state_dim, hidden_units=(128, 128), key=None):
        if key is None:
            key = jax.random.PRNGKey(0)
        dims = (state_dim,) + tuple(hidden_units)
        self.state_dim = state_dim
        self.feature_dim = dims[-1]
        self.num_layers = len(dims) - 1

        self.weights = []   # unpadded f32 (in, out), for the pure-JAX reference
        self.biases = []    # unpadded f32 (out,)   (zero, matching layer_init)
        self.w_blocks = []  # per-layer padded bf16 (k_pad, n_pad) for the kernel
        self.b_blocks = []  # per-layer padded f32 (1, n_pad)
        for l, (d_in, d_out) in enumerate(zip(dims[:-1], dims[1:])):
            key, sub = jax.random.split(key)
            w = orthogonal_weight(sub, d_out, d_in, w_scale=1.0)   # (in, out)
            b = jnp.zeros((d_out,), jnp.float32)
            self.weights.append(w)
            self.biases.append(b)
            # Layer 0 keeps its true K (= state_dim, no padded-x slab); later layers'
            # K equals the previous layer's 128-padded output width. N pads to 128 lanes
            # so every MXU pass and store is lane-dense.
            k_pad = d_in if l == 0 else _round_up(d_in, 128)
            n_pad = _round_up(d_out, 128)
            w_p = (jnp.zeros((k_pad, n_pad), jnp.bfloat16)
                   .at[:d_in, :d_out].set(w.astype(jnp.bfloat16)))
            b_p = jnp.zeros((1, n_pad), jnp.float32).at[0, :d_out].set(b)
            self.w_blocks.append(w_p)
            self.b_blocks.append(b_p)

    def __call__(self, x):
        B, d_in = x.shape
        assert d_in == self.state_dim
        tm, b_pad = _choose_batch_tile(B)
        x_f = x.astype(jnp.float32)
        if b_pad != B:
            x_f = jnp.pad(x_f, ((0, b_pad - B), (0, 0)))   # pad batch rows only
        out_pad = fused_mlp(x_f, self.w_blocks, self.b_blocks, tm=tm)
        return out_pad[:B, :self.feature_dim]


def reference_forward(x, weights, biases):
    """Pure-JAX reference matching the kernel numerics: bf16 operands, f32 accumulate."""
    h = x.astype(jnp.float32)
    for w, b in zip(weights, biases):
        y = jnp.dot(h.astype(jnp.bfloat16), w.astype(jnp.bfloat16),
                    preferred_element_type=jnp.float32)
        h = jnp.maximum(y + b, 0.0)
    return h


if __name__ == "__main__":
    key = jax.random.PRNGKey(0)
    k_param, k_x = jax.random.split(key)

    batch = 8
    state_dim = 16
    hidden_units = (32, 32)

    model = FCBodyPallas(state_dim, hidden_units, key=k_param)
    x = jax.random.normal(k_x, (batch, state_dim), jnp.float32)

    out = jax.block_until_ready(model(x))
    ref = reference_forward(x, model.weights, model.biases)
    assert out.shape == (batch, model.feature_dim)
    assert jnp.allclose(out, ref, atol=1e-3, rtol=1e-3), \
        float(jnp.max(jnp.abs(out - ref)))

    # Also exercise a batch large enough for a multi-step (>=2) parallel grid.
    x_big = jax.random.normal(k_x, (192, state_dim), jnp.float32)
    out_big = jax.block_until_ready(model(x_big))
    ref_big = reference_forward(x_big, model.weights, model.biases)
    assert jnp.allclose(out_big, ref_big, atol=1e-3, rtol=1e-3), \
        float(jnp.max(jnp.abs(out_big - ref_big)))

    print("KERNEL_OK")
</pallas_src>

<mosaic_0001>
module attributes {stable_mosaic.version = 11 : i64} {
  func.func @_mlp_kernel(%arg0: i32, %arg1: memref<8x16xf32, #tpu.memory_space<vmem>>, %arg2: memref<16x128xbf16, #tpu.memory_space<vmem>>, %arg3: memref<128x128xbf16, #tpu.memory_space<vmem>>, %arg4: memref<1x128xf32, #tpu.memory_space<vmem>>, %arg5: memref<1x128xf32, #tpu.memory_space<vmem>>, %arg6: memref<8x128xf32, #tpu.memory_space<vmem>>) attributes {dimension_semantics = [#tpu.dimension_semantics<parallel>], iteration_bounds = array<i64: 1>, scalar_prefetch = 0 : i64, scratch_operands = 0 : i64, tpu.core_type = #tpu.core_type<tc>, window_params = [{transform_indices = @transform_0, window_bounds = array<i64: 8, 16>}, {pipeline_mode = #tpu.pipeline_mode<synchronous>, transform_indices = @transform_1, window_bounds = array<i64: 16, 128>}, {pipeline_mode = #tpu.pipeline_mode<synchronous>, transform_indices = @transform_2, window_bounds = array<i64: 128, 128>}, {pipeline_mode = #tpu.pipeline_mode<synchronous>, transform_indices = @transform_3, window_bounds = array<i64: 1, 128>}, {pipeline_mode = #tpu.pipeline_mode<synchronous>, transform_indices = @transform_4, window_bounds = array<i64: 1, 128>}, {transform_indices = @transform_5, window_bounds = array<i64: 8, 128>}]} {
    %c0 = arith.constant 0 : index
    %c0_0 = arith.constant 0 : index
    %0 = vector.load %arg1[%c0, %c0_0] : memref<8x16xf32, #tpu.memory_space<vmem>>, vector<8x16xf32>
    %1 = arith.truncf %0 : vector<8x16xf32> to vector<8x16xbf16>
    %c0_1 = arith.constant 0 : index
    %c0_2 = arith.constant 0 : index
    %2 = vector.load %arg2[%c0_1, %c0_2] : memref<16x128xbf16, #tpu.memory_space<vmem>>, vector<16x128xbf16>
    %cst = arith.constant dense<0.000000e+00> : vector<8x128xf32>
    %3 = tpu.matmul %1, %2, %cst {dimension_numbers = #tpu.dot_dimension_numbers<[1], [0], [0], [1], [0, 0, 1, 1], [], []>} : vector<8x16xbf16>, vector<16x128xbf16>, vector<8x128xf32> -> vector<8x128xf32>
    %c0_3 = arith.constant 0 : index
    %c0_4 = arith.constant 0 : index
    %4 = vector.load %arg4[%c0_3, %c0_4] : memref<1x128xf32, #tpu.memory_space<vmem>>, vector<1x128xf32>
    %5 = vector.broadcast %4 : vector<1x128xf32> to vector<8x128xf32>
    %6 = arith.addf %3, %5 : vector<8x128xf32>
    %cst_5 = arith.constant 0.000000e+00 : f32
    %7 = vector.broadcast %cst_5 : f32 to vector<8x128xf32>
    %8 = arith.maximumf %6, %7 : vector<8x128xf32>
    %9 = arith.truncf %8 : vector<8x128xf32> to vector<8x128xbf16>
    %c0_6 = arith.constant 0 : index
    %c0_7 = arith.constant 0 : index
    %10 = vector.load %arg3[%c0_6, %c0_7] : memref<128x128xbf16, #tpu.memory_space<vmem>>, vector<128x128xbf16>
    %cst_8 = arith.constant dense<0.000000e+00> : vector<8x128xf32>
    %11 = tpu.matmul %9, %10, %cst_8 {dimension_numbers = #tpu.dot_dimension_numbers<[1], [0], [0], [1], [0, 0, 1, 1], [], []>} : vector<8x128xbf16>, vector<128x128xbf16>, vector<8x128xf32> -> vector<8x128xf32>
    %c0_9 = arith.constant 0 : index
    %c0_10 = arith.constant 0 : index
    %12 = vector.load %arg5[%c0_9, %c0_10] : memref<1x128xf32, #tpu.memory_space<vmem>>, vector<1x128xf32>
    %13 = vector.broadcast %12 : vector<1x128xf32> to vector<8x128xf32>
    %14 = arith.addf %11, %13 : vector<8x128xf32>
    %cst_11 = arith.constant 0.000000e+00 : f32
    %15 = vector.broadcast %cst_11 : f32 to vector<8x128xf32>
    %16 = arith.maximumf %14, %15 : vector<8x128xf32>
    %c0_12 = arith.constant 0 : index
    %c0_13 = arith.constant 0 : index
    %17 = vector.load %arg6[%c0_12, %c0_13] : memref<8x128xf32, #tpu.memory_space<vmem>>, vector<8x128xf32>
    tpu.vector_store %arg6[%c0_12, %c0_13], %16 {strides = array<i32>} : memref<8x128xf32, #tpu.memory_space<vmem>>, vector<8x128xf32>,
    return
  }
  func.func @transform_0(%arg0: i32) -> (i32, i32) {
    %c0_i32 = arith.constant 0 : i32
    %c0_i32_0 = arith.constant 0 : i32
    return %arg0, %c0_i32 : i32, i32
  }
  func.func @transform_1(%arg0: i32) -> (i32, i32) {
    %c0_i32 = arith.constant 0 : i32
    %c0_i32_0 = arith.constant 0 : i32
    %c0_i32_1 = arith.constant 0 : i32
    return %c0_i32, %c0_i32_0 : i32, i32
  }
  func.func @transform_2(%arg0: i32) -> (i32, i32) {
    %c0_i32 = arith.constant 0 : i32
    %c0_i32_0 = arith.constant 0 : i32
    %c0_i32_1 = arith.constant 0 : i32
    return %c0_i32, %c0_i32_0 : i32, i32
  }
  func.func @transform_3(%arg0: i32) -> (i32, i32) {
    %c0_i32 = arith.constant 0 : i32
    %c0_i32_0 = arith.constant 0 : i32
    %c0_i32_1 = arith.constant 0 : i32
    return %c0_i32, %c0_i32_0 : i32, i32
  }
  func.func @transform_4(%arg0: i32) -> (i32, i32) {
    %c0_i32 = arith.constant 0 : i32
    %c0_i32_0 = arith.constant 0 : i32
    %c0_i32_1 = arith.constant 0 : i32
    return %c0_i32, %c0_i32_0 : i32, i32
  }
  func.func @transform_5(%arg0: i32) -> (i32, i32) {
    %c0_i32 = arith.constant 0 : i32
    %c0_i32_0 = arith.constant 0 : i32
    return %arg0, %c0_i32 : i32, i32
  }
}

module attributes {stable_mosaic.version = 11 : i64} {
  func.func @_mlp_kernel(%arg0: i32, %arg1: memref<8x16xf32, #tpu.memory_space<vmem>>, %arg2: memref<16x128xbf16, #tpu.memory_space<vmem>>, %arg3: memref<128x128xbf16, #tpu.memory_space<vmem>>, %arg4: memref<1x128xf32, #tpu.memory_space<vmem>>, %arg5: memref<1x128xf32, #tpu.memory_space<vmem>>, %arg6: memref<8x128xf32, #tpu.memory_space<vmem>>) attributes {dimension_semantics = [#tpu.dimension_semantics<parallel>], iteration_bounds = array<i64: 1>, scalar_prefetch = 0 : i64, scratch_operands = 0 : i64, tpu.core_type = #tpu.core_type<tc>, window_params = [{transform_indices = @transform_0, window_bounds = array<i64: 8, 16>}, {pipeline_mode = #tpu.pipeline_mode<synchronous>, transform_indices = @transform_1, window_bounds = array<i64: 16, 128>}, {pipeline_mode = #tpu.pipeline_mode<synchronous>, transform_indices = @transform_2, window_bounds = array<i64: 128, 128>}, {pipeline_mode = #tpu.pipeline_mode<synchronous>, transform_indices = @transform_3, window_bounds = array<i64: 1, 128>}, {pipeline_mode = #tpu.pipeline_mode<synchronous>, transform_indices = @transform_4, window_bounds = array<i64: 1, 128>}, {transform_indices = @transform_5, window_bounds = array<i64: 8, 128>}]} {
    %c0 = arith.constant 0 : index
    %c0_0 = arith.constant 0 : index
    %0 = vector.load %arg1[%c0, %c0_0] : memref<8x16xf32, #tpu.memory_space<vmem>>, vector<8x16xf32>
    %1 = arith.truncf %0 : vector<8x16xf32> to vector<8x16xbf16>
    %c0_1 = arith.constant 0 : index
    %c0_2 = arith.constant 0 : index
    %2 = vector.load %arg2[%c0_1, %c0_2] : memref<16x128xbf16, #tpu.memory_space<vmem>>, vector<16x128xbf16>
    %cst = arith.constant dense<0.000000e+00> : vector<8x128xf32>
    %3 = tpu.matmul %1, %2, %cst {dimension_numbers = #tpu.dot_dimension_numbers<[1], [0], [0], [1], [0, 0, 1, 1], [], []>} : vector<8x16xbf16>, vector<16x128xbf16>, vector<8x128xf32> -> vector<8x128xf32>
    %c0_3 = arith.constant 0 : index
    %c0_4 = arith.constant 0 : index
    %4 = vector.load %arg4[%c0_3, %c0_4] : memref<1x128xf32, #tpu.memory_space<vmem>>, vector<1x128xf32>
    %5 = vector.broadcast %4 : vector<1x128xf32> to vector<8x128xf32>
    %6 = arith.addf %3, %5 : vector<8x128xf32>
    %cst_5 = arith.constant 0.000000e+00 : f32
    %7 = vector.broadcast %cst_5 : f32 to vector<8x128xf32>
    %8 = arith.maximumf %6, %7 : vector<8x128xf32>
    %9 = arith.truncf %8 : vector<8x128xf32> to vector<8x128xbf16>
    %c0_6 = arith.constant 0 : index
    %c0_7 = arith.constant 0 : index
    %10 = vector.load %arg3[%c0_6, %c0_7] : memref<128x128xbf16, #tpu.memory_space<vmem>>, vector<128x128xbf16>
    %cst_8 = arith.constant dense<0.000000e+00> : vector<8x128xf32>
    %11 = tpu.matmul %9, %10, %cst_8 {dimension_numbers = #tpu.dot_dimension_numbers<[1], [0], [0], [1], [0, 0, 1, 1], [], []>} : vector<8x128xbf16>, vector<128x128xbf16>, vector<8x128xf32> -> vector<8x128xf32>
    %c0_9 = arith.constant 0 : index
    %c0_10 = arith.constant 0 : index
    %12 = vector.load %arg5[%c0_9, %c0_10] : memref<1x128xf32, #tpu.memory_space<vmem>>, vector<1x128xf32>
    %13 = vector.broadcast %12 : vector<1x128xf32> to vector<8x128xf32>
    %14 = arith.addf %11, %13 : vector<8x128xf32>
    %cst_11 = arith.constant 0.000000e+00 : f32
    %15 = vector.broadcast %cst_11 : f32 to vector<8x128xf32>
    %16 = arith.maximumf %14, %15 : vector<8x128xf32>
    %c0_12 = arith.constant 0 : index
    %c0_13 = arith.constant 0 : index
    %17 = vector.load %arg6[%c0_12, %c0_13] : memref<8x128xf32, #tpu.memory_space<vmem>>, vector<8x128xf32>
    tpu.vector_store %arg6[%c0_12, %c0_13], %16 {strides = array<i32>} : memref<8x128xf32, #tpu.memory_space<vmem>>, vector<8x128xf32>,
    return
  }
  func.func @transform_0(%arg0: i32) -> (i32, i32) {
    %c0_i32 = arith.constant 0 : i32
    %c0_i32_0 = arith.constant 0 : i32
    return %arg0, %c0_i32 : i32, i32
  }
  func.func @transform_1(%arg0: i32) -> (i32, i32) {
    %c0_i32 = arith.constant 0 : i32
    %c0_i32_0 = arith.constant 0 : i32
    %c0_i32_1 = arith.constant 0 : i32
    return %c0_i32, %c0_i32_0 : i32, i32
  }
  func.func @transform_2(%arg0: i32) -> (i32, i32) {
    %c0_i32 = arith.constant 0 : i32
    %c0_i32_0 = arith.constant 0 : i32
    %c0_i32_1 = arith.constant 0 : i32
    return %c0_i32, %c0_i32_0 : i32, i32
  }
  func.func @transform_3(%arg0: i32) -> (i32, i32) {
    %c0_i32 = arith.constant 0 : i32
    %c0_i32_0 = arith.constant 0 : i32
    %c0_i32_1 = arith.constant 0 : i32
    return %c0_i32, %c0_i32_0 : i32, i32
  }
  func.func @transform_4(%arg0: i32) -> (i32, i32) {
    %c0_i32 = arith.constant 0 : i32
    %c0_i32_0 = arith.constant 0 : i32
    %c0_i32_1 = arith.constant 0 : i32
    return %c0_i32, %c0_i32_0 : i32, i32
  }
  func.func @transform_5(%arg0: i32) -> (i32, i32) {
    %c0_i32 = arith.constant 0 : i32
    %c0_i32_0 = arith.constant 0 : i32
    return %arg0, %c0_i32 : i32, i32
  }
}

</mosaic_0001>

<llo_original>
// kernel: tpu_custom_call.1
$region0: #{tpu_custom_call.1}
  #allocation0 [shape = 'u32[]', space=smem, size = 0x4, offset = 0x4, fixed_abs, tag = 'smem constant byte address 0x4 - core index']
  #allocation1 [shape = 'u32[144,128]{1,0:T(1,128)}', space=vmem, size = 0x12000, scoped, tag = 'internal scratch']
  %s0 = inlined_call_operand.hbm [shape: f32[8,16], index: 0, kind: input, shape index: {}]
  %s1 = inlined_call_operand.hbm [shape: bf16[16,128], index: 1, kind: input, shape index: {}]
  %s2 = inlined_call_operand.hbm [shape: bf16[128,128], index: 2, kind: input, shape index: {}]
  %s3 = inlined_call_operand.vmem [shape: f32[1,128], index: 3, kind: input, shape index: {}]
  %s4 = inlined_call_operand.vmem [shape: f32[1,128], index: 4, kind: input, shape index: {}]
  %s5 = inlined_call_operand.hbm [shape: f32[8,128], index: 5, kind: output, shape index: {}]
  %s6 = sld [smem:[#allocation0]]
  $region42: #{tpu_custom_call.1} parent=0
    _
  %s8 = ssub.s32 1, %s6
  %s9 = scalar_select 0, %s8, %s6
  $region1: #{tpu_custom_call.1} parent=0
    #allocation2 [shape = 'u8[4096]{0}', space=vmem, size = 0x1000, scoped, tag = 'input window, operand 0, single buffered']
    #allocation3 [shape = 's32[1]{0}', space=sflag, size = 0x4, scoped, tag = 'scoped memory for tpu_custom_call.1']
    #allocation4 [shape = 's32[1]{0}', space=sflag, size = 0x4, scoped, tag = 'scoped memory for tpu_custom_call.1']
    #allocation5 [shape = 'u8[4096]{0}', space=vmem, size = 0x1000, scoped, tag = 'input window, operand 1, single buffered']
    #allocation6 [shape = 's32[1]{0}', space=sflag, size = 0x4, scoped, tag = 'scoped memory for tpu_custom_call.1']
    #allocation7 [shape = 'u8[32768]{0}', space=vmem, size = 0x8000, scoped, tag = 'input window, operand 2, single buffered']
    #allocation8 [shape = 'u8[4096]{0}', space=vmem, size = 0x1000, scoped, tag = 'output window, operand 0, single buffered']
    %10 = vsyncpa [#allocation3], 0
    %11 = vsyncpa [#allocation6], 0
    %12 = vsyncpa [#allocation4], 0
    // Predicated region
    $region2: #{tpu_custom_call.1} parent=1 // pred_check
      _
    $region3: #{tpu_custom_call.1} parent=1 // pred_check_branch
      %14 = sbr.rel (0) target = $region5
    $region4: #{tpu_custom_call.1} parent=1 // pred_region
      %s16 = ssub.s32 128, 128
      %17 = vsyncadd [#allocation3], %s16
      %s19 = sshll.u32 [#allocation2], 4
      %s20 = int_to_ptr.vmem [resolvable:$true] %s19
      %22 = dma.hbm_to_vmem [thread:$0]  %s0, 128, %s20, [#allocation3]
    $region5: #{tpu_custom_call.1} parent=1 // pred_fallthru
      _
    // Predicated region
    $region6: #{tpu_custom_call.1} parent=1 // pred_check
      _
    $region7: #{tpu_custom_call.1} parent=1 // pred_check_branch
      %24 = sbr.rel (0) target = $region9
    $region8: #{tpu_custom_call.1} parent=1 // pred_region
      %s26 = ssub.s32 128, 128
      %27 = vsyncadd [#allocation6], %s26
      %s28 = sshll.u32 [#allocation5], 4
      %s29 = int_to_ptr.vmem [resolvable:$true] %s28
      %34 = dma.hbm_to_vmem [thread:$0]  %s1, 128, %s29, [#allocation6], 64, 64, 4
    $region9: #{tpu_custom_call.1} parent=1 // pred_fallthru
      _
    // Predicated region
    $region10: #{tpu_custom_call.1} parent=1 // pred_check
      _
    $region11: #{tpu_custom_call.1} parent=1 // pred_check_branch
      %36 = sbr.rel (0) target = $region13
    $region12: #{tpu_custom_call.1} parent=1 // pred_region
      %s38 = ssub.s32 1024, 1024
      %39 = vsyncadd [#allocation6], %s38
      %s40 = sshll.u32 [#allocation7], 4
      %s41 = int_to_ptr.vmem [resolvable:$true] %s40
      %46 = dma.hbm_to_vmem [thread:$0]  %s2, 1024, %s41, [#allocation6], 64, 64, 4
    $region13: #{tpu_custom_call.1} parent=1 // pred_fallthru
      _
    // Predicated region
    $region14: #{tpu_custom_call.1} parent=1 // pred_check
      _
    $region15: #{tpu_custom_call.1} parent=1 // pred_check_branch
      %48 = sbr.rel (0) target = $region17
    $region16: #{tpu_custom_call.1} parent=1 // pred_region
      _
    $region17: #{tpu_custom_call.1} parent=1 // pred_fallthru
      _
    // Predicated region
    $region18: #{tpu_custom_call.1} parent=1 // pred_check
      _
    $region19: #{tpu_custom_call.1} parent=1 // pred_check_branch
      %50 = sbr.rel (0) target = $region21
    $region20: #{tpu_custom_call.1} parent=1 // pred_region
      _
    $region21: #{tpu_custom_call.1} parent=1 // pred_fallthru
      _
    // Predicated region
    $region22: #{tpu_custom_call.1} parent=1 // pred_check
      _
    $region23: #{tpu_custom_call.1} parent=1 // pred_check_branch
      %52 = sbr.rel (0) target = $region25
    $region24: #{tpu_custom_call.1} parent=1 // pred_region
      %53 = dma.done [#allocation3], 128
    $region25: #{tpu_custom_call.1} parent=1 // pred_fallthru
      _
    // Predicated region
    $region26: #{tpu_custom_call.1} parent=1 // pred_check
      _
    $region27: #{tpu_custom_call.1} parent=1 // pred_check_branch
      %55 = sbr.rel (0) target = $region29
    $region28: #{tpu_custom_call.1} parent=1 // pred_region
      %56 = dma.done [#allocation6], 128
    $region29: #{tpu_custom_call.1} parent=1 // pred_fallthru
      _
    // Predicated region
    $region30: #{tpu_custom_call.1} parent=1 // pred_check
      _
    $region31: #{tpu_custom_call.1} parent=1 // pred_check_branch
      %58 = sbr.rel (0) target = $region33
    $region32: #{tpu_custom_call.1} parent=1 // pred_region
      %59 = dma.done [#allocation6], 1024
    $region33: #{tpu_custom_call.1} parent=1 // pred_fallthru
      _
    %v61 = vld [vmem:[#allocation2] sm:$0xff]
    %v62 = vpack.c.bf16 %v61, %v61
    %v63 = vld [vmem:[#allocation5] sm:$0xf]
    %v64 = vld [vmem:[#allocation5 + $0x4] sm:$0xf]
    %v65 = vld [vmem:[%s3] sm:$0x1]
    %v67 = vlaneseq
    %v68 = vshrl.u32 %v67, 7
    %v69 = vsub.s32 0, %v68
    %v70 = vrot.slane %v65, %v69
    %v74 = vunpack.c.l.b16 %v63
    %v75 = vunpack.c.l.b16 %v64
    %v76 = vpack.c.b16 %v75, %v74
    %vm78 = vcmask 130048
    %v80 = vsel %vm78, %v62, 0
    %82 = vmatprep.subr.bf16.mxu0 0
    %83 = vmatpush1.bf16.msra.mxu0 %v76
    %84 = vmatprep.subr.bf16.mxu0 0
    %85 = vmatpush1.bf16.msra.mxu0 0
    %86 = vmatprep.subr.bf16.mxu0 0
    %87 = vmatpush1.bf16.msra.mxu0 0
    %88 = vmatprep.subr.bf16.mxu0 0
    %89 = vmatpush1.bf16.msra.mxu0 0
    %90 = vmatprep.subr.bf16.mxu0 0
    %91 = vmatpush1.bf16.msra.mxu0 0
    %92 = vmatprep.subr.bf16.mxu0 0
    %93 = vmatpush1.bf16.msra.mxu0 0
    %94 = vmatprep.subr.bf16.mxu0 0
    %95 = vmatpush1.bf16.msra.mxu0 0
    %96 = vmatprep.subr.bf16.mxu0 0
    %97 = vmatpush1.bf16.msra.mxu0 0
    %98 = vmatprep.subr.bf16.mxu0 0
    %99 = vmatpush1.bf16.msra.mxu0 0
    %100 = vmatprep.subr.bf16.mxu0 0
    %101 = vmatpush1.bf16.msra.mxu0 0
    %102 = vmatprep.subr.bf16.mxu0 0
    %103 = vmatpush1.bf16.msra.mxu0 0
    %104 = vmatprep.subr.bf16.mxu0 0
    %105 = vmatpush1.bf16.msra.mxu0 0
    %106 = vmatprep.subr.bf16.mxu0 0
    %107 = vmatpush1.bf16.msra.mxu0 0
    %108 = vmatprep.subr.bf16.mxu0 0
    %109 = vmatpush1.bf16.msra.mxu0 0
    %110 = vmatprep.subr.bf16.mxu0 0
    %111 = vmatpush1.bf16.msra.mxu0 0
    %112 = vmatprep.subr.bf16.mxu0 0
    %113 = vmatpush1.bf16.msra.mxu0 0
    %114 = vmatprep.mubr.bf16.mxu0 0
    %115 = vmatmul.mubr.bf16.gmra.mrb[0].mxu0 %v80
    %v116 = vpop.f32.mrb[0].mxu0
    %v117 = vadd.f32 %v70, %v116
    %v118 = vpop.f32.mrb[0].mxu0
    %v119 = vpop.f32.mrb[0].mxu0
    %v120 = vpop.f32.mrb[0].mxu0
    %121 = vdwg.mxu0
    %v122 = vmax.f32 %v117, 0.0
    %v123 = vpack.c.bf16 %v122, %v122
    %v124 = vld [vmem:[#allocation7] sm:$0xf]
    %v125 = vld [vmem:[#allocation7 + $0x4] sm:$0xf]
    %v126 = vld [vmem:[#allocation7 + $0x8] sm:$0xf]
    %v127 = vld [vmem:[#allocation7 + $0xc] sm:$0xf]
    %v128 = vld [vmem:[#allocation7 + $0x10] sm:$0xf]
    %v129 = vld [vmem:[#allocation7 + $0x14] sm:$0xf]
    %v130 = vld [vmem:[#allocation7 + $0x18] sm:$0xf]
    %v131 = vld [vmem:[#allocation7 + $0x1c] sm:$0xf]
    %v132 = vld [vmem:[#allocation7 + $0x20] sm:$0xf]
    %v133 = vld [vmem:[#allocation7 + $0x24] sm:$0xf]
    %v134 = vld [vmem:[#allocation7 + $0x28] sm:$0xf]
    %v135 = vld [vmem:[#allocation7 + $0x2c] sm:$0xf]
    %v136 = vld [vmem:[#allocation7 + $0x30] sm:$0xf]
    %v137 = vld [vmem:[#allocation7 + $0x34] sm:$0xf]
    %v138 = vld [vmem:[#allocation7 + $0x38] sm:$0xf]
    %v139 = vld [vmem:[#allocation7 + $0x3c] sm:$0xf]
    %v140 = vld [vmem:[%s4] sm:$0x1]
    %v142 = vlaneseq
    %v143 = vshrl.u32 %v142, 7
    %v144 = vsub.s32 0, %v143
    %v145 = vrot.slane %v140, %v144
    %v163 = vunpack.c.l.b16 %v124
    %v164 = vunpack.c.l.b16 %v125
    %v165 = vunpack.c.l.b16 %v126
    %v166 = vunpack.c.l.b16 %v127
    %v167 = vunpack.c.l.b16 %v128
    %v168 = vunpack.c.l.b16 %v129
    %v169 = vunpack.c.l.b16 %v130
    %v170 = vunpack.c.l.b16 %v131
    %v171 = vunpack.c.l.b16 %v132
    %v172 = vunpack.c.l.b16 %v133
    %v173 = vunpack.c.l.b16 %v134
    %v174 = vunpack.c.l.b16 %v135
    %v175 = vunpack.c.l.b16 %v136
    %v176 = vunpack.c.l.b16 %v137
    %v177 = vunpack.c.l.b16 %v138
    %v178 = vunpack.c.l.b16 %v139
    %v179 = vpack.c.b16 %v164, %v163
    %v180 = vpack.c.b16 %v166, %v165
    %v181 = vpack.c.b16 %v168, %v167
    %v182 = vpack.c.b16 %v170, %v169
    %v183 = vpack.c.b16 %v172, %v171
    %v184 = vpack.c.b16 %v174, %v173
    %v185 = vpack.c.b16 %v176, %v175
    %v186 = vpack.c.b16 %v178, %v177
    %195 = vmatprep.subr.bf16.mxu0 0
    %196 = vmatpush1.bf16.msra.mxu0 %v179
    %197 = vmatprep.subr.bf16.mxu0 0
    %198 = vmatpush1.bf16.msra.mxu0 %v180
    %199 = vmatprep.subr.bf16.mxu0 0
    %200 = vmatpush1.bf16.msra.mxu0 %v181
    %201 = vmatprep.subr.bf16.mxu0 0
    %202 = vmatpush1.bf16.msra.mxu0 %v182
    %203 = vmatprep.subr.bf16.mxu0 0
    %204 = vmatpush1.bf16.msra.mxu0 %v183
    %205 = vmatprep.subr.bf16.mxu0 0
    %206 = vmatpush1.bf16.msra.mxu0 %v184
    %207 = vmatprep.subr.bf16.mxu0 0
    %208 = vmatpush1.bf16.msra.mxu0 %v185
    %209 = vmatprep.subr.bf16.mxu0 0
    %210 = vmatpush1.bf16.msra.mxu0 %v186
    %211 = vmatprep.subr.bf16.mxu0 0
    %212 = vmatpush1.bf16.msra.mxu0 0
    %213 = vmatprep.subr.bf16.mxu0 0
    %214 = vmatpush1.bf16.msra.mxu0 0
    %215 = vmatprep.subr.bf16.mxu0 0
    %216 = vmatpush1.bf16.msra.mxu0 0
    %217 = vmatprep.subr.bf16.mxu0 0
    %218 = vmatpush1.bf16.msra.mxu0 0
    %219 = vmatprep.subr.bf16.mxu0 0
    %220 = vmatpush1.bf16.msra.mxu0 0
    %221 = vmatprep.subr.bf16.mxu0 0
    %222 = vmatpush1.bf16.msra.mxu0 0
    %223 = vmatprep.subr.bf16.mxu0 0
    %224 = vmatpush1.bf16.msra.mxu0 0
    %225 = vmatprep.subr.bf16.mxu0 0
    %226 = vmatpush1.bf16.msra.mxu0 0
    %227 = vmatprep.mubr.bf16.mxu0 0
    %228 = vmatmul.mubr.bf16.gmra.mrb[0].mxu0 %v123
    %v229 = vpop.f32.mrb[0].mxu0
    %v230 = vadd.f32 %v145, %v229
    %v231 = vpop.f32.mrb[0].mxu0
    %v232 = vpop.f32.mrb[0].mxu0
    %v233 = vpop.f32.mrb[0].mxu0
    %234 = vdwg.mxu0
    %v235 = vmax.f32 %v230, 0.0
    %236 = vst [vmem:[#allocation8] sm:$0xff] %v235
    // Predicated region
    $region34: #{tpu_custom_call.1} parent=1 // pred_check
      _
    $region35: #{tpu_custom_call.1} parent=1 // pred_check_branch
      %238 = sbr.rel (0) target = $region37
    $region36: #{tpu_custom_call.1} parent=1 // pred_region
      %s240 = ssub.s32 128, 128
      %241 = vsyncadd [#allocation4], %s240
      %s243 = sshll.u32 [#allocation8], 4
      %s244 = int_to_ptr.vmem [resolvable:$true] %s243
      %246 = dma.vmem_to_hbm [thread:$0]  %s244, 128, %s5, [#allocation4]
    $region37: #{tpu_custom_call.1} parent=1 // pred_fallthru
      _
    // Predicated region
    $region38: #{tpu_custom_call.1} parent=1 // pred_check
      _
    $region39: #{tpu_custom_call.1} parent=1 // pred_check_branch
      %248 = sbr.rel (0) target = $region41
    $region40: #{tpu_custom_call.1} parent=1 // pred_region
      %249 = dma.done [#allocation4], 128
    $region41: #{tpu_custom_call.1} parent=1 // pred_fallthru
      _
    %250 = vsyncpa [#allocation3], 1
    %251 = vsyncpa [#allocation6], 1
    %252 = vsyncpa [#allocation4], 1

// kernel: tpu_custom_call.1
$region0: #{tpu_custom_call.1}
  #allocation0 [shape = 'u32[]', space=smem, size = 0x4, offset = 0x4, fixed_abs, tag = 'smem constant byte address 0x4 - core index']
  #allocation1 [shape = 'u32[144,128]{1,0:T(1,128)}', space=vmem, size = 0x12000, scoped, tag = 'internal scratch']
  %s0 = inlined_call_operand.hbm [shape: f32[8,16], index: 0, kind: input, shape index: {}]
  %s1 = inlined_call_operand.hbm [shape: bf16[16,128], index: 1, kind: input, shape index: {}]
  %s2 = inlined_call_operand.hbm [shape: bf16[128,128], index: 2, kind: input, shape index: {}]
  %s3 = inlined_call_operand.vmem [shape: f32[1,128], index: 3, kind: input, shape index: {}]
  %s4 = inlined_call_operand.vmem [shape: f32[1,128], index: 4, kind: input, shape index: {}]
  %s5 = inlined_call_operand.hbm [shape: f32[8,128], index: 5, kind: output, shape index: {}]
  %s6 = sld [smem:[#allocation0]]
  $region42: #{tpu_custom_call.1} parent=0
    _
  %s8 = ssub.s32 1, %s6
  %s9 = scalar_select 0, %s8, %s6
  $region1: #{tpu_custom_call.1} parent=0
    #allocation2 [shape = 'u8[4096]{0}', space=vmem, size = 0x1000, scoped, tag = 'input window, operand 0, single buffered']
    #allocation3 [shape = 's32[1]{0}', space=sflag, size = 0x4, scoped, tag = 'scoped memory for tpu_custom_call.1']
    #allocation4 [shape = 's32[1]{0}', space=sflag, size = 0x4, scoped, tag = 'scoped memory for tpu_custom_call.1']
    #allocation5 [shape = 'u8[4096]{0}', space=vmem, size = 0x1000, scoped, tag = 'input window, operand 1, single buffered']
    #allocation6 [shape = 's32[1]{0}', space=sflag, size = 0x4, scoped, tag = 'scoped memory for tpu_custom_call.1']
    #allocation7 [shape = 'u8[32768]{0}', space=vmem, size = 0x8000, scoped, tag = 'input window, operand 2, single buffered']
    #allocation8 [shape = 'u8[4096]{0}', space=vmem, size = 0x1000, scoped, tag = 'output window, operand 0, single buffered']
    %10 = vsyncpa [#allocation3], 0
    %11 = vsyncpa [#allocation6], 0
    %12 = vsyncpa [#allocation4], 0
    // Predicated region
    $region2: #{tpu_custom_call.1} parent=1 // pred_check
      _
    $region3: #{tpu_custom_call.1} parent=1 // pred_check_branch
      %14 = sbr.rel (0) target = $region5
    $region4: #{tpu_custom_call.1} parent=1 // pred_region
      %s16 = ssub.s32 128, 128
      %17 = vsyncadd [#allocation3], %s16
      %s19 = sshll.u32 [#allocation2], 4
      %s20 = int_to_ptr.vmem [resolvable:$true] %s19
      %22 = dma.hbm_to_vmem [thread:$0]  %s0, 128, %s20, [#allocation3]
    $region5: #{tpu_custom_call.1} parent=1 // pred_fallthru
      _
    // Predicated region
    $region6: #{tpu_custom_call.1} parent=1 // pred_check
      _
    $region7: #{tpu_custom_call.1} parent=1 // pred_check_branch
      %24 = sbr.rel (0) target = $region9
    $region8: #{tpu_custom_call.1} parent=1 // pred_region
      %s26 = ssub.s32 128, 128
      %27 = vsyncadd [#allocation6], %s26
      %s28 = sshll.u32 [#allocation5], 4
      %s29 = int_to_ptr.vmem [resolvable:$true] %s28
      %34 = dma.hbm_to_vmem [thread:$0]  %s1, 128, %s29, [#allocation6], 64, 64, 4
    $region9: #{tpu_custom_call.1} parent=1 // pred_fallthru
      _
    // Predicated region
    $region10: #{tpu_custom_call.1} parent=1 // pred_check
      _
    $region11: #{tpu_custom_call.1} parent=1 // pred_check_branch
      %36 = sbr.rel (0) target = $region13
    $region12: #{tpu_custom_call.1} parent=1 // pred_region
      %s38 = ssub.s32 1024, 1024
      %39 = vsyncadd [#allocation6], %s38
      %s40 = sshll.u32 [#allocation7], 4
      %s41 = int_to_ptr.vmem [resolvable:$true] %s40
      %46 = dma.hbm_to_vmem [thread:$0]  %s2, 1024, %s41, [#allocation6], 64, 64, 4
    $region13: #{tpu_custom_call.1} parent=1 // pred_fallthru
      _
    // Predicated region
    $region14: #{tpu_custom_call.1} parent=1 // pred_check
      _
    $region15: #{tpu_custom_call.1} parent=1 // pred_check_branch
      %48 = sbr.rel (0) target = $region17
    $region16: #{tpu_custom_call.1} parent=1 // pred_region
      _
    $region17: #{tpu_custom_call.1} parent=1 // pred_fallthru
      _
    // Predicated region
    $region18: #{tpu_custom_call.1} parent=1 // pred_check
      _
    $region19: #{tpu_custom_call.1} parent=1 // pred_check_branch
      %50 = sbr.rel (0) target = $region21
    $region20: #{tpu_custom_call.1} parent=1 // pred_region
      _
    $region21: #{tpu_custom_call.1} parent=1 // pred_fallthru
      _
    // Predicated region
    $region22: #{tpu_custom_call.1} parent=1 // pred_check
      _
    $region23: #{tpu_custom_call.1} parent=1 // pred_check_branch
      %52 = sbr.rel (0) target = $region25
    $region24: #{tpu_custom_call.1} parent=1 // pred_region
      %53 = dma.done [#allocation3], 128
    $region25: #{tpu_custom_call.1} parent=1 // pred_fallthru
      _
    // Predicated region
    $region26: #{tpu_custom_call.1} parent=1 // pred_check
      _
    $region27: #{tpu_custom_call.1} parent=1 // pred_check_branch
      %55 = sbr.rel (0) target = $region29
    $region28: #{tpu_custom_call.1} parent=1 // pred_region
      %56 = dma.done [#allocation6], 128
    $region29: #{tpu_custom_call.1} parent=1 // pred_fallthru
      _
    // Predicated region
    $region30: #{tpu_custom_call.1} parent=1 // pred_check
      _
    $region31: #{tpu_custom_call.1} parent=1 // pred_check_branch
      %58 = sbr.rel (0) target = $region33
    $region32: #{tpu_custom_call.1} parent=1 // pred_region
      %59 = dma.done [#allocation6], 1024
    $region33: #{tpu_custom_call.1} parent=1 // pred_fallthru
      _
    %v61 = vld [vmem:[#allocation2] sm:$0xff]
    %v62 = vpack.c.bf16 %v61, %v61
    %v63 = vld [vmem:[#allocation5] sm:$0xf]
    %v64 = vld [vmem:[#allocation5 + $0x4] sm:$0xf]
    %v65 = vld [vmem:[%s3] sm:$0x1]
    %v67 = vlaneseq
    %v68 = vshrl.u32 %v67, 7
    %v69 = vsub.s32 0, %v68
    %v70 = vrot.slane %v65, %v69
    %v74 = vunpack.c.l.b16 %v63
    %v75 = vunpack.c.l.b16 %v64
    %v76 = vpack.c.b16 %v75, %v74
    %vm78 = vcmask 130048
    %v80 = vsel %vm78, %v62, 0
    %82 = vmatprep.subr.bf16.mxu0 0
    %83 = vmatpush1.bf16.msra.mxu0 %v76
    %84 = vmatprep.subr.bf16.mxu0 0
    %85 = vmatpush1.bf16.msra.mxu0 0
    %86 = vmatprep.subr.bf16.mxu0 0
    %87 = vmatpush1.bf16.msra.mxu0 0
    %88 = vmatprep.subr.bf16.mxu0 0
    %89 = vmatpush1.bf16.msra.mxu0 0
    %90 = vmatprep.subr.bf16.mxu0 0
    %91 = vmatpush1.bf16.msra.mxu0 0
    %92 = vmatprep.subr.bf16.mxu0 0
    %93 = vmatpush1.bf16.msra.mxu0 0
    %94 = vmatprep.subr.bf16.mxu0 0
    %95 = vmatpush1.bf16.msra.mxu0 0
    %96 = vmatprep.subr.bf16.mxu0 0
    %97 = vmatpush1.bf16.msra.mxu0 0
    %98 = vmatprep.subr.bf16.mxu0 0
    %99 = vmatpush1.bf16.msra.mxu0 0
    %100 = vmatprep.subr.bf16.mxu0 0
    %101 = vmatpush1.bf16.msra.mxu0 0
    %102 = vmatprep.subr.bf16.mxu0 0
    %103 = vmatpush1.bf16.msra.mxu0 0
    %104 = vmatprep.subr.bf16.mxu0 0
    %105 = vmatpush1.bf16.msra.mxu0 0
    %106 = vmatprep.subr.bf16.mxu0 0
    %107 = vmatpush1.bf16.msra.mxu0 0
    %108 = vmatprep.subr.bf16.mxu0 0
    %109 = vmatpush1.bf16.msra.mxu0 0
    %110 = vmatprep.subr.bf16.mxu0 0
    %111 = vmatpush1.bf16.msra.mxu0 0
    %112 = vmatprep.subr.bf16.mxu0 0
    %113 = vmatpush1.bf16.msra.mxu0 0
    %114 = vmatprep.mubr.bf16.mxu0 0
    %115 = vmatmul.mubr.bf16.gmra.mrb[0].mxu0 %v80
    %v116 = vpop.f32.mrb[0].mxu0
    %v117 = vadd.f32 %v70, %v116
    %v118 = vpop.f32.mrb[0].mxu0
    %v119 = vpop.f32.mrb[0].mxu0
    %v120 = vpop.f32.mrb[0].mxu0
    %121 = vdwg.mxu0
    %v122 = vmax.f32 %v117, 0.0
    %v123 = vpack.c.bf16 %v122, %v122
    %v124 = vld [vmem:[#allocation7] sm:$0xf]
    %v125 = vld [vmem:[#allocation7 + $0x4] sm:$0xf]
    %v126 = vld [vmem:[#allocation7 + $0x8] sm:$0xf]
    %v127 = vld [vmem:[#allocation7 + $0xc] sm:$0xf]
    %v128 = vld [vmem:[#allocation7 + $0x10] sm:$0xf]
    %v129 = vld [vmem:[#allocation7 + $0x14] sm:$0xf]
    %v130 = vld [vmem:[#allocation7 + $0x18] sm:$0xf]
    %v131 = vld [vmem:[#allocation7 + $0x1c] sm:$0xf]
    %v132 = vld [vmem:[#allocation7 + $0x20] sm:$0xf]
    %v133 = vld [vmem:[#allocation7 + $0x24] sm:$0xf]
    %v134 = vld [vmem:[#allocation7 + $0x28] sm:$0xf]
    %v135 = vld [vmem:[#allocation7 + $0x2c] sm:$0xf]
    %v136 = vld [vmem:[#allocation7 + $0x30] sm:$0xf]
    %v137 = vld [vmem:[#allocation7 + $0x34] sm:$0xf]
    %v138 = vld [vmem:[#allocation7 + $0x38] sm:$0xf]
    %v139 = vld [vmem:[#allocation7 + $0x3c] sm:$0xf]
    %v140 = vld [vmem:[%s4] sm:$0x1]
    %v142 = vlaneseq
    %v143 = vshrl.u32 %v142, 7
    %v144 = vsub.s32 0, %v143
    %v145 = vrot.slane %v140, %v144
    %v163 = vunpack.c.l.b16 %v124
    %v164 = vunpack.c.l.b16 %v125
    %v165 = vunpack.c.l.b16 %v126
    %v166 = vunpack.c.l.b16 %v127
    %v167 = vunpack.c.l.b16 %v128
    %v168 = vunpack.c.l.b16 %v129
    %v169 = vunpack.c.l.b16 %v130
    %v170 = vunpack.c.l.b16 %v131
    %v171 = vunpack.c.l.b16 %v132
    %v172 = vunpack.c.l.b16 %v133
    %v173 = vunpack.c.l.b16 %v134
    %v174 = vunpack.c.l.b16 %v135
    %v175 = vunpack.c.l.b16 %v136
    %v176 = vunpack.c.l.b16 %v137
    %v177 = vunpack.c.l.b16 %v138
    %v178 = vunpack.c.l.b16 %v139
    %v179 = vpack.c.b16 %v164, %v163
    %v180 = vpack.c.b16 %v166, %v165
    %v181 = vpack.c.b16 %v168, %v167
    %v182 = vpack.c.b16 %v170, %v169
    %v183 = vpack.c.b16 %v172, %v171
    %v184 = vpack.c.b16 %v174, %v173
    %v185 = vpack.c.b16 %v176, %v175
    %v186 = vpack.c.b16 %v178, %v177
    %195 = vmatprep.subr.bf16.mxu0 0
    %196 = vmatpush1.bf16.msra.mxu0 %v179
    %197 = vmatprep.subr.bf16.mxu0 0
    %198 = vmatpush1.bf16.msra.mxu0 %v180
    %199 = vmatprep.subr.bf16.mxu0 0
    %200 = vmatpush1.bf16.msra.mxu0 %v181
    %201 = vmatprep.subr.bf16.mxu0 0
    %202 = vmatpush1.bf16.msra.mxu0 %v182
    %203 = vmatprep.subr.bf16.mxu0 0
    %204 = vmatpush1.bf16.msra.mxu0 %v183
    %205 = vmatprep.subr.bf16.mxu0 0
    %206 = vmatpush1.bf16.msra.mxu0 %v184
    %207 = vmatprep.subr.bf16.mxu0 0
    %208 = vmatpush1.bf16.msra.mxu0 %v185
    %209 = vmatprep.subr.bf16.mxu0 0
    %210 = vmatpush1.bf16.msra.mxu0 %v186
    %211 = vmatprep.subr.bf16.mxu0 0
    %212 = vmatpush1.bf16.msra.mxu0 0
    %213 = vmatprep.subr.bf16.mxu0 0
    %214 = vmatpush1.bf16.msra.mxu0 0
    %215 = vmatprep.subr.bf16.mxu0 0
    %216 = vmatpush1.bf16.msra.mxu0 0
    %217 = vmatprep.subr.bf16.mxu0 0
    %218 = vmatpush1.bf16.msra.mxu0 0
    %219 = vmatprep.subr.bf16.mxu0 0
    %220 = vmatpush1.bf16.msra.mxu0 0
    %221 = vmatprep.subr.bf16.mxu0 0
    %222 = vmatpush1.bf16.msra.mxu0 0
    %223 = vmatprep.subr.bf16.mxu0 0
    %224 = vmatpush1.bf16.msra.mxu0 0
    %225 = vmatprep.subr.bf16.mxu0 0
    %226 = vmatpush1.bf16.msra.mxu0 0
    %227 = vmatprep.mubr.bf16.mxu0 0
    %228 = vmatmul.mubr.bf16.gmra.mrb[0].mxu0 %v123
    %v229 = vpop.f32.mrb[0].mxu0
    %v230 = vadd.f32 %v145, %v229
    %v231 = vpop.f32.mrb[0].mxu0
    %v232 = vpop.f32.mrb[0].mxu0
    %v233 = vpop.f32.mrb[0].mxu0
    %234 = vdwg.mxu0
    %v235 = vmax.f32 %v230, 0.0
    %236 = vst [vmem:[#allocation8] sm:$0xff] %v235
    // Predicated region
    $region34: #{tpu_custom_call.1} parent=1 // pred_check
      _
    $region35: #{tpu_custom_call.1} parent=1 // pred_check_branch
      %238 = sbr.rel (0) target = $region37
    $region36: #{tpu_custom_call.1} parent=1 // pred_region
      %s240 = ssub.s32 128, 128
      %241 = vsyncadd [#allocation4], %s240
      %s243 = sshll.u32 [#allocation8], 4
      %s244 = int_to_ptr.vmem [resolvable:$true] %s243
      %246 = dma.vmem_to_hbm [thread:$0]  %s244, 128, %s5, [#allocation4]
    $region37: #{tpu_custom_call.1} parent=1 // pred_fallthru
      _
    // Predicated region
    $region38: #{tpu_custom_call.1} parent=1 // pred_check
      _
    $region39: #{tpu_custom_call.1} parent=1 // pred_check_branch
      %248 = sbr.rel (0) target = $region41
    $region40: #{tpu_custom_call.1} parent=1 // pred_region
      %249 = dma.done [#allocation4], 128
    $region41: #{tpu_custom_call.1} parent=1 // pred_fallthru
      _
    %250 = vsyncpa [#allocation3], 1
    %251 = vsyncpa [#allocation6], 1
    %252 = vsyncpa [#allocation4], 1

</llo_original>
